<compile_context>
chip_gen: v7x
topology: tpu7x:2x2x1
jax: 0.10.0
libtpu: 0.0.40
codegen_flags: <defaults>
</compile_context>

<pallas_src>
import math
import functools

import jax
import jax.numpy as jnp
from jax.experimental import pallas as pl
from jax.experimental.pallas import tpu as pltpu


def _pos_enc_kernel(inv_freq_ref, bias_ref, x_ref, o_ref, *, group):
    """Blocks: inv_freq/bias (1, C) f32; x/o (TB, TL, C).

    Merged column c corresponds to original feature d = c % D and intra-group
    position offset g = c // D.  The wrapper pre-bakes
        inv_freq[c] = exp(-(d - d % 2) * ln(10000) / D)
        bias[c]     = g * inv_freq[c] + (d % 2) * pi / 2
    so the angle of element (row r, col c) of this tile is
        ((row0 + r) * group) * inv_freq[c] + bias[c]
    and pe = sin(angle) gives sin for even d and cos (via +pi/2) for odd d.
    """
    TL = x_ref.shape[1]
    row0 = pl.program_id(0) * TL                                  # merged-row offset
    r = jax.lax.broadcasted_iota(jnp.int32, (TL, 1), 0)
    pos = ((row0 + r) * group).astype(jnp.float32)                # (TL, 1)
    angle = pos * inv_freq_ref[...] + bias_ref[...]               # (TL, C) broadcast
    pe = jnp.sin(angle)                                           # 1 EUP op / elem
    # f32 accumulate, single cast at the store.
    o_ref[...] = (x_ref[...].astype(jnp.float32) + pe[None, :, :]).astype(o_ref.dtype)
    # TODO(synk): training-mode stochastic dropout (pltpu.prng_seed /
    # pltpu.prng_random_bits); eval-mode dropout is the identity.


def _plan_tiling(B, L, D, itemsize):
    """Pick lane grouping, batch fold, rows-per-tile and a VMEM limit."""
    # Lane grouping: merge G consecutive positions into the lane axis so the
    # block's last dim is a multiple of 128 (unmasked stores).
    if D % 128 == 0:
        group = 1
    else:
        g0 = 128 // math.gcd(D, 128)
        if L % g0 == 0:
            group = g0
            while group * 2 * D <= 512 and L % (group * 2) == 0:
                group *= 2
        else:
            group = 1  # degraded (masked stores) but still correct
    C = group * D
    R = L // group                     # rows of the merged (B, R, C) view

    sub = {1: 32, 2: 16}.get(itemsize, 8)   # sublane multiple per dtype

    # Fold the whole batch into one block when it stays small: fewer grid
    # steps and B-times larger DMAs (mem-bound kernel -> pure win).
    if B * min(sub, R) * C * itemsize <= (4 << 20):
        tb = B
    else:
        tb = 1
    nb = B // tb

    # Rows per tile: target ~3 MiB per x block; cdiv grid, ragged last tile OK.
    target = 3 << 20
    tl = max(target // (tb * C * itemsize), 1)
    if tl >= R:
        tl = R
        if R >= 2 * sub:
            # keep >= 2 L-tiles so both v7x TensorCores get work
            tl = pl.cdiv(pl.cdiv(R, 2), sub) * sub
    else:
        tl = max((tl // sub) * sub, sub)
        tl = min(tl, R)
    nl = pl.cdiv(R, tl)

    block_bytes = tb * tl * C * itemsize
    # double-buffered in + out blocks + tiny tables + slack; explicit so v5e's
    # 16 MiB default scoped limit never bites, capped well under v7x's 64 MiB.
    need = 4 * block_bytes + 4 * C * 4 + (2 << 20)
    vmem_limit = int(min(max(need, 32 << 20), 56 << 20))
    return group, C, R, tb, nb, tl, nl, vmem_limit


def positional_encoding(x):
    """x: (B, L, D) float array.  Returns dropout_eval(x + PE) == x + PE."""
    B, L, D = x.shape
    assert D % 2 == 0, "d_model must be even (as in the PyTorch module)"
    itemsize = jnp.dtype(x.dtype).itemsize
    group, C, R, tb, nb, tl, nl, vmem_limit = _plan_tiling(B, L, D, itemsize)

    # Tiny per-column tables of the merged lane axis (C f32 values each).
    c_idx = jnp.arange(C, dtype=jnp.int32)
    d_idx = c_idx % D                                   # original feature index
    g_idx = (c_idx // D).astype(jnp.float32)            # intra-group position offset
    even_d = (d_idx - (d_idx & 1)).astype(jnp.float32)
    inv_freq = jnp.exp(even_d * (-math.log(10000.0) / float(D)))
    phase = (d_idx & 1).astype(jnp.float32) * (math.pi / 2.0)
    col_bias = (g_idx * inv_freq + phase).reshape(1, C)
    inv_freq = inv_freq.reshape(1, C)

    x_m = x.reshape(B, R, C)   # contiguous merge of (group, D) into the lane axis

    kernel = functools.partial(_pos_enc_kernel, group=group)
    out = pl.pallas_call(
        kernel,
        out_shape=jax.ShapeDtypeStruct((B, R, C), x.dtype),
        grid_spec=pltpu.PrefetchScalarGridSpec(
            num_scalar_prefetch=0,
            grid=(nl, nb),
            in_specs=[
                pl.BlockSpec((1, C), lambda l, b: (0, 0)),          # inv_freq
                pl.BlockSpec((1, C), lambda l, b: (0, 0)),          # col_bias
                pl.BlockSpec((tb, tl, C), lambda l, b: (b, l, 0)),  # x
            ],
            out_specs=pl.BlockSpec((tb, tl, C), lambda l, b: (b, l, 0)),
        ),
        compiler_params=pltpu.CompilerParams(
            # PE is recomputed per step (cheap, hidden under DMA), so there is
            # no cross-step state and both axes can shard across TensorCores.
            dimension_semantics=("parallel", "parallel"),
            vmem_limit_bytes=vmem_limit,
        ),
    )(inv_freq, col_bias, x_m)
    return out.reshape(B, L, D)


def _reference(x):
    """Pure-JAX reference mirroring the PyTorch buffer construction."""
    B, L, D = x.shape
    position = jnp.arange(L, dtype=jnp.float32)[:, None]
    div_term = jnp.exp(jnp.arange(0, D, 2, dtype=jnp.float32)
                       * (-math.log(10000.0) / D))
    pe = jnp.zeros((L, D), dtype=jnp.float32)
    pe = pe.at[:, 0::2].set(jnp.sin(position * div_term))
    pe = pe.at[:, 1::2].set(jnp.cos(position * div_term))
    return (x.astype(jnp.float32) + pe[None, :, :]).astype(x.dtype)


if __name__ == "__main__":
    key = jax.random.PRNGKey(0)
    B, L, D = 2, 8, 32          # batch=2, seq(max_len)=8, d_model=32
    x = jax.random.normal(key, (B, L, D), dtype=jnp.float32)

    out = jax.block_until_ready(positional_encoding(x))

    ref = _reference(x)
    assert out.shape == (B, L, D)
    assert jnp.allclose(out, ref, atol=1e-4, rtol=1e-4), "mismatch vs reference"

    print("KERNEL_OK")
</pallas_src>

<mosaic_0001>
module attributes {stable_mosaic.version = 11 : i64} {
  func.func @_pos_enc_kernel(%arg0: i32, %arg1: i32, %arg2: memref<1x256xf32, #tpu.memory_space<vmem>>, %arg3: memref<1x256xf32, #tpu.memory_space<vmem>>, %arg4: memref<2x1x256xf32, #tpu.memory_space<vmem>>, %arg5: memref<2x1x256xf32, #tpu.memory_space<vmem>>) attributes {dimension_semantics = [#tpu.dimension_semantics<parallel>, #tpu.dimension_semantics<parallel>], iteration_bounds = array<i64: 1, 1>, scalar_prefetch = 0 : i64, scratch_operands = 0 : i64, tpu.core_type = #tpu.core_type<tc>, window_params = [{pipeline_mode = #tpu.pipeline_mode<synchronous>, transform_indices = @transform_0, window_bounds = array<i64: 1, 256>}, {pipeline_mode = #tpu.pipeline_mode<synchronous>, transform_indices = @transform_1, window_bounds = array<i64: 1, 256>}, {transform_indices = @transform_2, window_bounds = array<i64: 2, 1, 256>}, {transform_indices = @transform_3, window_bounds = array<i64: 2, 1, 256>}]} {
    %c1_i32 = arith.constant 1 : i32
    %0 = arith.muli %arg0, %c1_i32 : i32
    %1 = tpu.iota {dimensions = array<i32: 0>} : vector<1x1xi32>
    %2 = vector.broadcast %0 : i32 to vector<1x1xi32>
    %3 = arith.addi %2, %1 : vector<1x1xi32>
    %c8_i32 = arith.constant 8 : i32
    %4 = vector.broadcast %c8_i32 : i32 to vector<1x1xi32>
    %5 = arith.muli %3, %4 : vector<1x1xi32>
    %6 = arith.sitofp %5 : vector<1x1xi32> to vector<1x1xf32>
    %c0 = arith.constant 0 : index
    %c0_0 = arith.constant 0 : index
    %7 = vector.load %arg2[%c0, %c0_0] : memref<1x256xf32, #tpu.memory_space<vmem>>, vector<1x256xf32>
    %8 = vector.broadcast %6 : vector<1x1xf32> to vector<1x256xf32>
    %9 = arith.mulf %8, %7 : vector<1x256xf32>
    %c0_1 = arith.constant 0 : index
    %c0_2 = arith.constant 0 : index
    %10 = vector.load %arg3[%c0_1, %c0_2] : memref<1x256xf32, #tpu.memory_space<vmem>>, vector<1x256xf32>
    %11 = arith.addf %9, %10 : vector<1x256xf32>
    %12 = math.sin %11 : vector<1x256xf32>
    %c0_3 = arith.constant 0 : index
    %c0_4 = arith.constant 0 : index
    %c0_5 = arith.constant 0 : index
    %13 = vector.load %arg4[%c0_3, %c0_4, %c0_5] : memref<2x1x256xf32, #tpu.memory_space<vmem>>, vector<2x1x256xf32>
    %14 = vector.shape_cast %12 : vector<1x256xf32> to vector<1x1x256xf32>
    %15 = vector.broadcast %14 : vector<1x1x256xf32> to vector<2x1x256xf32>
    %16 = arith.addf %13, %15 : vector<2x1x256xf32>
    %c0_6 = arith.constant 0 : index
    %c0_7 = arith.constant 0 : index
    %c0_8 = arith.constant 0 : index
    %17 = vector.load %arg5[%c0_6, %c0_7, %c0_8] : memref<2x1x256xf32, #tpu.memory_space<vmem>>, vector<2x1x256xf32>
    tpu.vector_store %arg5[%c0_6, %c0_7, %c0_8], %16 {strides = array<i32>} : memref<2x1x256xf32, #tpu.memory_space<vmem>>, vector<2x1x256xf32>,
    return
  }
  func.func @transform_0(%arg0: i32, %arg1: i32) -> (i32, i32) {
    %c0_i32 = arith.constant 0 : i32
    %c0_i32_0 = arith.constant 0 : i32
    %c0_i32_1 = arith.constant 0 : i32
    return %c0_i32, %c0_i32_0 : i32, i32
  }
  func.func @transform_1(%arg0: i32, %arg1: i32) -> (i32, i32) {
    %c0_i32 = arith.constant 0 : i32
    %c0_i32_0 = arith.constant 0 : i32
    %c0_i32_1 = arith.constant 0 : i32
    return %c0_i32, %c0_i32_0 : i32, i32
  }
  func.func @transform_2(%arg0: i32, %arg1: i32) -> (i32, i32, i32) {
    %c0_i32 = arith.constant 0 : i32
    %c0_i32_0 = arith.constant 0 : i32
    return %arg1, %arg0, %c0_i32 : i32, i32, i32
  }
  func.func @transform_3(%arg0: i32, %arg1: i32) -> (i32, i32, i32) {
    %c0_i32 = arith.constant 0 : i32
    %c0_i32_0 = arith.constant 0 : i32
    return %arg1, %arg0, %c0_i32 : i32, i32, i32
  }
}

</mosaic_0001>

<llo_original>
// kernel: tpu_custom_call.1
$region0: #{tpu_custom_call.1}
  #allocation0 [shape = 'u32[]', space=smem, size = 0x4, offset = 0x4, fixed_abs, tag = 'smem constant byte address 0x4 - core index']
  #allocation1 [shape = 'u32[144,128]{1,0:T(1,128)}', space=vmem, size = 0x12000, scoped, tag = 'internal scratch']
  %s0 = inlined_call_operand.hbm [shape: f32[1,256], index: 0, kind: input, shape index: {}]
  %s1 = inlined_call_operand.vmem [shape: f32[1,256], index: 1, kind: input, shape index: {}]
  %s2 = inlined_call_operand.vmem [shape: f32[2,1,256], index: 2, kind: input, shape index: {}]
  %s3 = inlined_call_operand.hbm [shape: f32[2,1,256], index: 3, kind: output, shape index: {}]
  %s4 = sld [smem:[#allocation0]]
  $region26: #{tpu_custom_call.1} parent=0
    _
  %s6 = ssub.s32 1, %s4
  %s7 = scalar_select 0, %s6, %s4
  $region1: #{tpu_custom_call.1} parent=0
    #allocation2 [shape = 'u8[1024]{0}', space=vmem, size = 0x400, scoped, tag = 'input window, operand 0, single buffered']
    #allocation3 [shape = 's32[1]{0}', space=sflag, size = 0x4, scoped, tag = 'scoped memory for tpu_custom_call.1']
    #allocation4 [shape = 's32[1]{0}', space=sflag, size = 0x4, scoped, tag = 'scoped memory for tpu_custom_call.1']
    #allocation5 [shape = 'u8[2048]{0}', space=vmem, size = 0x800, scoped, tag = 'output window, operand 0, single buffered']
    %8 = vsyncpa [#allocation3], 0
    %9 = vsyncpa [#allocation4], 0
    // Predicated region
    $region2: #{tpu_custom_call.1} parent=1 // pred_check
      _
    $region3: #{tpu_custom_call.1} parent=1 // pred_check_branch
      %11 = sbr.rel (0) target = $region5
    $region4: #{tpu_custom_call.1} parent=1 // pred_region
      %s13 = ssub.s32 32, 32
      %14 = vsyncadd [#allocation3], %s13
      %s16 = sshll.u32 [#allocation2], 4
      %s17 = int_to_ptr.vmem [resolvable:$true] %s16
      %19 = dma.hbm_to_vmem [thread:$0]  %s0, 32, %s17, [#allocation3]
    $region5: #{tpu_custom_call.1} parent=1 // pred_fallthru
      _
    // Predicated region
    $region6: #{tpu_custom_call.1} parent=1 // pred_check
      _
    $region7: #{tpu_custom_call.1} parent=1 // pred_check_branch
      %21 = sbr.rel (0) target = $region9
    $region8: #{tpu_custom_call.1} parent=1 // pred_region
      _
    $region9: #{tpu_custom_call.1} parent=1 // pred_fallthru
      _
    // Predicated region
    $region10: #{tpu_custom_call.1} parent=1 // pred_check
      _
    $region11: #{tpu_custom_call.1} parent=1 // pred_check_branch
      %23 = sbr.rel (0) target = $region13
    $region12: #{tpu_custom_call.1} parent=1 // pred_region
      _
    $region13: #{tpu_custom_call.1} parent=1 // pred_fallthru
      _
    // Predicated region
    $region14: #{tpu_custom_call.1} parent=1 // pred_check
      _
    $region15: #{tpu_custom_call.1} parent=1 // pred_check_branch
      %25 = sbr.rel (0) target = $region17
    $region16: #{tpu_custom_call.1} parent=1 // pred_region
      %26 = dma.done [#allocation3], 32
    $region17: #{tpu_custom_call.1} parent=1 // pred_fallthru
      _
    %v27 = vlaneseq
    %v28 = vshrl.u32 %v27, 7
    %v29 = vstv 0
    %v30 = vadd.s32 %v29, %v28
    %v31 = vmul.u32 %v30, 8
    %v32 = vcvt.s32.f32 %v31
    %v33 = vld [vmem:[#allocation2] sm:$0x3]
    %v35 = vlaneseq
    %v36 = vshrl.u32 %v35, 7
    %v37 = vsub.s32 0, %v36
    %v38 = vrot.slane %v33, %v37
    %v39 = vlaneseq
    %v40 = vshrl.u32 %v39, 7
    %v41 = vsub.s32 1, %v40
    %v42 = vrot.slane %v33, %v41
    %v45 = vmul.f32 %v32, %v38
    %v46 = vmul.f32 %v32, %v42
    %v47 = vld [vmem:[%s1] sm:$0x3]
    %v49 = vlaneseq
    %v50 = vshrl.u32 %v49, 7
    %v51 = vsub.s32 0, %v50
    %v52 = vrot.slane %v47, %v51
    %v53 = vlaneseq
    %v54 = vshrl.u32 %v53, 7
    %v55 = vsub.s32 1, %v54
    %v56 = vrot.slane %v47, %v55
    %v59 = vadd.f32 %v45, %v52
    %v60 = vadd.f32 %v46, %v56
    %v61 = vand.u32 2147483647, %v59
    %vm62 = vcmp.le.f32.partialorder %v61, 0.7853982
    %vm63 = vcmp.lt.s32.totalorder %v59, 0
    %v64 = vand.u32 %v59, 2139095040
    %v65 = vshrl.u32 %v64, 23
    %v66 = vsub.s32 %v65, 127
    %v67 = vand.u32 2147483647, %v59
    %v68 = vand.u32 %v67, 8388607
    %v69 = vor.u32 %v68, 8388608
    %v70 = vsub.s32 0, %v69
    %v71 = vadd.s32 %v66, 1
    %vm72 = vcmp.gt.s32.totalorder %v71, 0
    %v73 = vsel %vm72, %v71, 0
    %v74 = vshrl.u32 %v73, 5
    %v75 = vand.u32 %v73, 31
    %v76 = vsub.s32 32, %v75
    %v77 = vshrl.u32 683565275, %v76
    %v78 = vshll.u32 683565275, %v75
    %v79 = vshrl.u32 2475754826, %v76
    %v80 = vor.u32 %v78, %v79
    %v81 = vshll.u32 2475754826, %v75
    %v82 = vshrl.u32 2131351028, %v76
    %v83 = vor.u32 %v81, %v82
    %v84 = vshll.u32 2131351028, %v75
    %v85 = vshrl.u32 2102212464, %v76
    %v86 = vor.u32 %v84, %v85
    %v87 = vshll.u32 2102212464, %v75
    %v88 = vshrl.u32 920167782, %v76
    %v89 = vor.u32 %v87, %v88
    %v90 = vshll.u32 920167782, %v75
    %v91 = vshrl.u32 1326507024, %v76
    %v92 = vor.u32 %v90, %v91
    %vm93 = vcmp.lt.s32.totalorder %v74, 1
    %vm94 = vcmp.lt.s32.totalorder %v74, 2
    %vm95 = vcmp.lt.s32.totalorder %v74, 3
    %vm96 = vcmp.lt.s32.totalorder %v74, 4
    %v97 = vsel %vm93, %v77, %v80
    %v98 = vsel %vm96, %v86, 2102212464
    %v99 = vsel %vm95, %v83, %v98
    %v100 = vsel %vm94, %v97, %v99
    %v101 = vsel %vm93, %v80, %v83
    %v102 = vsel %vm96, %v89, 920167782
    %v103 = vsel %vm95, %v86, %v102
    %v104 = vsel %vm94, %v101, %v103
    %v105 = vsel %vm93, %v83, %v86
    %v106 = vsel %vm96, %v92, 1326507024
    %v107 = vsel %vm95, %v89, %v106
    %v108 = vsel %vm94, %v105, %v107
    %v109 = vshll.u32 %v69, 8
    %v110 = vmul.u32.u64.compose %v109, %v108
    %v111 = vextract.low.u32 %v110
    %v112 = vextract.high.u32 %v110
    %v113 = vmul.u32.u64.compose %v109, %v104
    %v114 = vextract.low.u32 %v113
    %v115 = vextract.high.u32 %v113
    %v116 = vmul.u32 %v109, %v100
    %v117 = vadd.s32 %v112, %v114
    %vm118 = vc.u32 %v112, %v114
    %v119 = vadd.s32 %v115, 1
    %v120 = vsel %vm118, %v119, %v115
    %v121 = vadd.s32 %v116, %v120
    %v122 = vadd.s32 %v121, 536870912
    %v123 = vshrl.u32 %v122, 30
    %v124 = vshll.u32 %v123, 30
    %v125 = vsub.s32 %v121, %v124
    %vm126 = vcmp.lt.s32.totalorder %v125, 0
    %v127 = vsub.s32 0, %v125
    %v128 = vsel %vm126, %v127, %v125
    %v129 = vclz %v128
    %v130 = vsub.s32 %v129, 2
    %vm131 = vcmp.gt.s32.totalorder 0, %v130
    %v132 = vsel %vm131, 0, %v130
    %v133 = vsub.s32 32, %v132
    %v134 = vshll.u32 %v125, %v132
    %v135 = vshrl.u32 %v117, %v133
    %v136 = vor.u32 %v134, %v135
    %v137 = vsub.s32 4294967266, %v132
    %v138 = vadd.s32 %v137, 127
    %v139 = vshll.u32 %v138, 23
    %v140 = vor.u32 4788187, %v139
    %v141 = vand.u32 2147483647, %v140
    %v143 = vcvt.s32.f32 %v136
    %v144 = vmul.f32 %v143, %v141
    %v145 = vxor.u32 %v144, 2147483648
    %v146 = vsel %vm63, %v145, %v144
    %v147 = vsub.s32 4, %v123
    %v148 = vsel %vm63, %v147, %v123
    %v149 = vsel %vm62, %v59, %v146
    %v150 = vsel %vm62, 0, %v148
    %v151 = vcosq.f32.pop %v149
    %v152 = vsinq.f32.pop %v149
    %vm153 = vweird.f32 %v59
    %v154 = vadd.s32 %v150, 3
    %v155 = vand.u32 %v154, 3
    %vm156 = vcmp.lt.s32.totalorder %v155, 2
    %vm157 = vcmp.eq.s32.totalorder %v155, 0
    %v158 = vxor.u32 %v152, 2147483648
    %v159 = vsel %vm157, %v151, %v158
    %vm160 = vcmp.eq.s32.totalorder %v155, 2
    %v161 = vxor.u32 %v151, 2147483648
    %v162 = vsel %vm160, %v161, %v152
    %v163 = vsel %vm156, %v159, %v162
    %v164 = vsel %vm153, nan, %v163
    %v165 = vand.u32 2147483647, %v60
    %vm166 = vcmp.le.f32.partialorder %v165, 0.7853982
    %vm167 = vcmp.lt.s32.totalorder %v60, 0
    %v168 = vand.u32 %v60, 2139095040
    %v169 = vshrl.u32 %v168, 23
    %v170 = vsub.s32 %v169, 127
    %v171 = vand.u32 2147483647, %v60
    %v172 = vand.u32 %v171, 8388607
    %v173 = vor.u32 %v172, 8388608
    %v174 = vsub.s32 0, %v173
    %v175 = vadd.s32 %v170, 1
    %vm176 = vcmp.gt.s32.totalorder %v175, 0
    %v177 = vsel %vm176, %v175, 0
    %v178 = vshrl.u32 %v177, 5
    %v179 = vand.u32 %v177, 31
    %v180 = vsub.s32 32, %v179
    %v181 = vshrl.u32 683565275, %v180
    %v182 = vshll.u32 683565275, %v179
    %v183 = vshrl.u32 2475754826, %v180
    %v184 = vor.u32 %v182, %v183
    %v185 = vshll.u32 2475754826, %v179
    %v186 = vshrl.u32 2131351028, %v180
    %v187 = vor.u32 %v185, %v186
    %v188 = vshll.u32 2131351028, %v179
    %v189 = vshrl.u32 2102212464, %v180
    %v190 = vor.u32 %v188, %v189
    %v191 = vshll.u32 2102212464, %v179
    %v192 = vshrl.u32 920167782, %v180
    %v193 = vor.u32 %v191, %v192
    %v194 = vshll.u32 920167782, %v179
    %v195 = vshrl.u32 1326507024, %v180
    %v196 = vor.u32 %v194, %v195
    %vm197 = vcmp.lt.s32.totalorder %v178, 1
    %vm198 = vcmp.lt.s32.totalorder %v178, 2
    %vm199 = vcmp.lt.s32.totalorder %v178, 3
    %vm200 = vcmp.lt.s32.totalorder %v178, 4
    %v201 = vsel %vm197, %v181, %v184
    %v202 = vsel %vm200, %v190, 2102212464
    %v203 = vsel %vm199, %v187, %v202
    %v204 = vsel %vm198, %v201, %v203
    %v205 = vsel %vm197, %v184, %v187
    %v206 = vsel %vm200, %v193, 920167782
    %v207 = vsel %vm199, %v190, %v206
    %v208 = vsel %vm198, %v205, %v207
    %v209 = vsel %vm197, %v187, %v190
    %v210 = vsel %vm200, %v196, 1326507024
    %v211 = vsel %vm199, %v193, %v210
    %v212 = vsel %vm198, %v209, %v211
    %v213 = vshll.u32 %v173, 8
    %v214 = vmul.u32.u64.compose %v213, %v212
    %v215 = vextract.low.u32 %v214
    %v216 = vextract.high.u32 %v214
    %v217 = vmul.u32.u64.compose %v213, %v208
    %v218 = vextract.low.u32 %v217
    %v219 = vextract.high.u32 %v217
    %v220 = vmul.u32 %v213, %v204
    %v221 = vadd.s32 %v216, %v218
    %vm222 = vc.u32 %v216, %v218
    %v223 = vadd.s32 %v219, 1
    %v224 = vsel %vm222, %v223, %v219
    %v225 = vadd.s32 %v220, %v224
    %v226 = vadd.s32 %v225, 536870912
    %v227 = vshrl.u32 %v226, 30
    %v228 = vshll.u32 %v227, 30
    %v229 = vsub.s32 %v225, %v228
    %vm230 = vcmp.lt.s32.totalorder %v229, 0
    %v231 = vsub.s32 0, %v229
    %v232 = vsel %vm230, %v231, %v229
    %v233 = vclz %v232
    %v234 = vsub.s32 %v233, 2
    %vm235 = vcmp.gt.s32.totalorder 0, %v234
    %v236 = vsel %vm235, 0, %v234
    %v237 = vsub.s32 32, %v236
    %v238 = vshll.u32 %v229, %v236
    %v239 = vshrl.u32 %v221, %v237
    %v240 = vor.u32 %v238, %v239
    %v241 = vsub.s32 4294967266, %v236
    %v242 = vadd.s32 %v241, 127
    %v243 = vshll.u32 %v242, 23
    %v244 = vor.u32 4788187, %v243
    %v245 = vand.u32 2147483647, %v244
    %v247 = vcvt.s32.f32 %v240
    %v248 = vmul.f32 %v247, %v245
    %v249 = vxor.u32 %v248, 2147483648
    %v250 = vsel %vm167, %v249, %v248
    %v251 = vsub.s32 4, %v227
    %v252 = vsel %vm167, %v251, %v227
    %v253 = vsel %vm166, %v60, %v250
    %v254 = vsel %vm166, 0, %v252
    %v255 = vcosq.f32.pop %v253
    %v256 = vsinq.f32.pop %v253
    %vm257 = vweird.f32 %v60
    %v258 = vadd.s32 %v254, 3
    %v259 = vand.u32 %v258, 3
    %vm260 = vcmp.lt.s32.totalorder %v259, 2
    %vm261 = vcmp.eq.s32.totalorder %v259, 0
    %v262 = vxor.u32 %v256, 2147483648
    %v263 = vsel %vm261, %v255, %v262
    %vm264 = vcmp.eq.s32.totalorder %v259, 2
    %v265 = vxor.u32 %v255, 2147483648
    %v266 = vsel %vm264, %v265, %v256
    %v267 = vsel %vm260, %v263, %v266
    %v268 = vsel %vm257, nan, %v267
    %v269 = vld [vmem:[%s2] sm:$0x3]
    %v270 = vld [vmem:[%s2 + $0x2] sm:$0x3]
    %v273 = vcombine.low %v164, %v268
    %v275 = vunpack.c.l.s4 1966171168
    %v276 = vunpack.c.0.s8 %v275
    %v277 = vlaneseq
    %v278 = vshrl.u32 %v277, 7
    %v279 = vsub.s32 %v276, %v278
    %v280 = vrot.slane %v273, %v279
    %v282 = vunpack.c.l.s4 1966171168
    %v283 = vunpack.c.0.s8 %v282
    %v284 = vlaneseq
    %v285 = vshrl.u32 %v284, 7
    %v286 = vsub.s32 %v283, %v285
    %v287 = vrot.slane %v280, %v286
    %v289 = vadd.f32 %v269, %v287
    %v290 = vadd.f32 %v270, %v287
    %v291 = vlaneseq
    %vm292 = vcmp.ge.s32.totalorder %v291, 0
    %vm293 = vcmp.lt.s32.totalorder %v291, 256
    %vm294 = vmand %vm292, %vm293
    %295 = vst.msk [vmem:[#allocation5] sm:$0x3] %vm294, %v289
    %296 = vst.msk [vmem:[#allocation5 + $0x2] sm:$0x3] %vm294, %v290
    // Predicated region
    $region18: #{tpu_custom_call.1} parent=1 // pred_check
      _
    $region19: #{tpu_custom_call.1} parent=1 // pred_check_branch
      %298 = sbr.rel (0) target = $region21
    $region20: #{tpu_custom_call.1} parent=1 // pred_region
      %s300 = ssub.s32 64, 64
      %301 = vsyncadd [#allocation4], %s300
      %s302 = sshll.u32 [#allocation5], 4
      %s303 = int_to_ptr.vmem [resolvable:$true] %s302
      %308 = dma.vmem_to_hbm [thread:$0]  %s303, 64, %s3, [#allocation4], 32, 32, 2
    $region21: #{tpu_custom_call.1} parent=1 // pred_fallthru
      _
    // Predicated region
    $region22: #{tpu_custom_call.1} parent=1 // pred_check
      _
    $region23: #{tpu_custom_call.1} parent=1 // pred_check_branch
      %310 = sbr.rel (0) target = $region25
    $region24: #{tpu_custom_call.1} parent=1 // pred_region
      %311 = dma.done [#allocation4], 64
    $region25: #{tpu_custom_call.1} parent=1 // pred_fallthru
      _
    %312 = vsyncpa [#allocation3], 1
    %313 = vsyncpa [#allocation4], 1

</llo_original>
